<compile_context>
chip_gen: v6e
topology: v6e:2x2x1
jax: 0.10.0
libtpu: 0.0.40
codegen_flags: <defaults>
</compile_context>

<pallas_src>
import jax
import jax.numpy as jnp
from jax.experimental import pallas as pl
from jax.experimental.pallas import tpu as pltpu


def _round_up(x, m):
    return ((x + m - 1) // m) * m


# ---------------------------------------------------------------------------
# Kernels
# ---------------------------------------------------------------------------

def _ffn_kernel_fused(x_ref, w1_ref, b1_ref, w2_ref, b2_ref, o_ref):
    """Whole FFN for one row tile; weights resident across the entire grid."""
    x = x_ref[...].astype(w1_ref.dtype)
    h = jnp.dot(x, w1_ref[...], preferred_element_type=jnp.float32)
    h = jnp.maximum(h + b1_ref[...], 0.0)                      # bias + ReLU (f32)
    y = jnp.dot(h.astype(w2_ref.dtype), w2_ref[...],
                preferred_element_type=jnp.float32)
    o_ref[...] = (y + b2_ref[...]).astype(o_ref.dtype)


def _ffn_body(x_ref, w1_ref, b1_ref, w2_ref, b2_ref, o_ref, acc_ref):
    """One d_ff chunk's contribution, accumulated into acc_ref (may be o_ref)."""
    j = pl.program_id(1)

    @pl.when(j == 0)
    def _init():
        acc_ref[...] = jnp.zeros_like(acc_ref)

    x = x_ref[...].astype(w1_ref.dtype)
    h = jnp.dot(x, w1_ref[...], preferred_element_type=jnp.float32)
    h = jnp.maximum(h + b1_ref[...], 0.0)
    acc_ref[...] += jnp.dot(h.astype(w2_ref.dtype), w2_ref[...],
                            preferred_element_type=jnp.float32)

    @pl.when(j == pl.num_programs(1) - 1)
    def _finalize():
        o_ref[...] = (acc_ref[...] + b2_ref[...]).astype(o_ref.dtype)


def _ffn_kernel_streamed_scratch(x_ref, w1_ref, b1_ref, w2_ref, b2_ref,
                                 o_ref, acc_ref):
    _ffn_body(x_ref, w1_ref, b1_ref, w2_ref, b2_ref, o_ref, acc_ref)


def _ffn_kernel_streamed_f32out(x_ref, w1_ref, b1_ref, w2_ref, b2_ref, o_ref):
    # f32 output block is resident across the d_ff axis: use it directly as
    # the accumulator and skip the extra f32 VMEM scratch (feedback item).
    _ffn_body(x_ref, w1_ref, b1_ref, w2_ref, b2_ref, o_ref, o_ref)


# ---------------------------------------------------------------------------
# Generation-aware tile selection
# ---------------------------------------------------------------------------

# (default row tile, VMEM working-set budget, vmem_limit_bytes for Mosaic)
_GEN_CFG = {
    "v5e": (256, 40 << 20, 64 << 20),     # 16 MiB default scoped -> raise it
    "v6e": (1024, 80 << 20, 100 << 20),   # 128 MiB VMEM, highest FLOP:HBM ratio
    "v7x": (512, 36 << 20, 56 << 20),     # only 64 MiB VMEM per TC
    "other": (512, 40 << 20, 64 << 20),
}


def _tpu_generation():
    try:
        kind = jax.devices()[0].device_kind.lower()
    except Exception:
        return "other"
    if "v7" in kind:
        return "v7x"
    if "v6" in kind:
        return "v6e"
    if "v5 lite" in kind or "v5e" in kind or "v5lite" in kind:
        return "v5e"
    return "other"


def _fused_vmem_bytes(tile_m, d_model, d_ff, x_bytes, out_bytes, w_bytes):
    return (2 * tile_m * d_model * x_bytes          # x tile (2x buffered)
            + 2 * d_model * d_ff * w_bytes          # W1 (constant block index)
            + 2 * d_ff * d_model * w_bytes          # W2
            + 2 * tile_m * d_model * out_bytes      # output tile
            + 2 * (d_ff + d_model) * 4              # biases (f32)
            + tile_m * d_ff * 4)                    # hidden activation (f32)


def _streamed_vmem_bytes(tile_m, tile_f, d_model, x_bytes, out_bytes, w_bytes,
                         need_scratch):
    b = (2 * tile_m * d_model * x_bytes
         + 2 * d_model * tile_f * w_bytes
         + 2 * tile_f * d_model * w_bytes
         + 2 * tile_m * d_model * out_bytes
         + 2 * (tile_f + d_model) * 4
         + tile_m * tile_f * 4)
    if need_scratch:
        b += tile_m * d_model * 4                   # f32 accumulator scratch
    return b


def _choose_tiles(M, d_model, d_ff, x_bytes, out_bytes, w_bytes,
                  want_tile_m, budget, need_scratch, row_align):
    """Returns (tile_m, tile_f); tile_f=None means the fused (resident-W) path."""
    tile_m = min(want_tile_m, _round_up(M, row_align))
    tile_m = max(row_align, (tile_m // row_align) * row_align)

    # Fused path: keep weights resident as long as a >=256-row tile still fits.
    tm = tile_m
    while True:
        if _fused_vmem_bytes(tm, d_model, d_ff, x_bytes, out_bytes,
                             w_bytes) <= budget:
            return tm, None
        if tm <= 256:
            break
        tm = max(256, tm // 2)

    # Streamed path: pick the largest d_ff chunk (prefer exact divisors so no
    # weight padding is needed); shrink the row tile only as a last resort,
    # since weight HBM traffic scales with 1/tile_m.
    d_ff_min = _round_up(d_ff, 128)
    cands = [c for c in (1024, 768, 512, 384, 256, 128) if c <= d_ff_min]
    tm = tile_m
    while True:
        for exact in (True, False):
            for tf in cands:
                if exact and d_ff % tf != 0:
                    continue
                if _streamed_vmem_bytes(tm, tf, d_model, x_bytes, out_bytes,
                                        w_bytes, need_scratch) <= budget:
                    return tm, tf
        if tm <= row_align:
            return row_align, cands[-1]     # rely on vmem_limit headroom
        tm = max(row_align, ((tm // 2) // row_align) * row_align)


# ---------------------------------------------------------------------------
# Wrapper
# ---------------------------------------------------------------------------

def positionwise_feedforward(x, w1, b1, w2, b2, *, compute_dtype=jnp.bfloat16,
                             tile_m=None, vmem_budget_bytes=None):
    """y = relu(x @ w1 + b1) @ w2 + b2 for x of shape (..., d_model).

    Weights are (in, out).  Keep them in `compute_dtype` (bf16) at rest so the
    per-call cast below is a no-op (avoids an extra HBM pass over W1/W2).
    """
    orig_dtype = x.dtype
    *lead, d_model = x.shape
    d_ff = w1.shape[1]
    M = 1
    for s in lead:
        M *= s

    gen = _tpu_generation()
    want_tile_m, budget, vmem_limit = _GEN_CFG[gen]

    itemsize = jnp.dtype(orig_dtype).itemsize
    row_align = max(8, 32 // max(1, itemsize))      # 8 (f32) / 16 (bf16) / 32 (8-bit)
    if tile_m is not None:
        want_tile_m = max(row_align, (int(tile_m) // row_align) * row_align)
    if vmem_budget_bytes is not None:
        budget = int(vmem_budget_bytes)

    x_bytes = itemsize
    out_bytes = itemsize
    w_bytes = jnp.dtype(compute_dtype).itemsize
    need_scratch = orig_dtype != jnp.float32

    tm, tf = _choose_tiles(M, d_model, d_ff, x_bytes, out_bytes, w_bytes,
                           want_tile_m, budget, need_scratch, row_align)

    # x: no padding, no cast (the bf16 cast happens inside the kernel so x is
    # read from HBM exactly once at its native width).
    x2d = x.reshape(M, d_model)
    w1c = w1 if w1.dtype == compute_dtype else w1.astype(compute_dtype)
    w2c = w2 if w2.dtype == compute_dtype else w2.astype(compute_dtype)
    b1_2d = b1.reshape(1, d_ff).astype(jnp.float32)
    b2_2d = b2.reshape(1, d_model).astype(jnp.float32)

    num_row_tiles = pl.cdiv(M, tm)

    if tf is None:
        # ---- Fused path: weights resident (constant block index), 1-D grid. ----
        grid = (num_row_tiles,)
        in_specs = [
            pl.BlockSpec((tm, d_model), lambda i: (i, 0)),        # x rows
            pl.BlockSpec((d_model, d_ff), lambda i: (0, 0)),      # W1 (resident)
            pl.BlockSpec((1, d_ff), lambda i: (0, 0)),            # b1
            pl.BlockSpec((d_ff, d_model), lambda i: (0, 0)),      # W2 (resident)
            pl.BlockSpec((1, d_model), lambda i: (0, 0)),         # b2
        ]
        out_specs = pl.BlockSpec((tm, d_model), lambda i: (i, 0))
        scratch_shapes = []
        kernel = _ffn_kernel_fused
        dim_sem = ("parallel",)
        weight_passes = 1
        d_ff_pad = d_ff
    else:
        # ---- Streamed path: inner "arbitrary" d_ff axis + resident accumulator. ----
        d_ff_pad = _round_up(d_ff, tf)
        if d_ff_pad != d_ff:
            pad_f = d_ff_pad - d_ff
            # Zero-padded d_ff columns contribute exactly 0: relu(x@0+0) @ 0.
            w1c = jnp.pad(w1c, ((0, 0), (0, pad_f)))
            b1_2d = jnp.pad(b1_2d, ((0, 0), (0, pad_f)))
            w2c = jnp.pad(w2c, ((0, pad_f), (0, 0)))
        num_ff_tiles = d_ff_pad // tf
        grid = (num_row_tiles, num_ff_tiles)
        in_specs = [
            pl.BlockSpec((tm, d_model), lambda i, j: (i, 0)),     # x rows
            pl.BlockSpec((d_model, tf), lambda i, j: (0, j)),     # W1 chunk
            pl.BlockSpec((1, tf), lambda i, j: (0, j)),           # b1 chunk
            pl.BlockSpec((tf, d_model), lambda i, j: (j, 0)),     # W2 chunk
            pl.BlockSpec((1, d_model), lambda i, j: (0, 0)),      # b2
        ]
        out_specs = pl.BlockSpec((tm, d_model), lambda i, j: (i, 0))
        if need_scratch:
            scratch_shapes = [pltpu.VMEM((tm, d_model), jnp.float32)]
            kernel = _ffn_kernel_streamed_scratch
        else:
            scratch_shapes = []
            kernel = _ffn_kernel_streamed_f32out
        dim_sem = ("parallel", "arbitrary")
        weight_passes = num_row_tiles

    # Advisory cost hint for XLA's scheduler around the custom call.
    flops = 4 * M * d_model * d_ff
    bytes_accessed = int(
        M * d_model * x_bytes
        + weight_passes * 2 * d_model * d_ff_pad * w_bytes
        + (d_ff_pad + d_model) * 4
        + M * d_model * out_bytes)

    out2d = pl.pallas_call(
        kernel,
        out_shape=jax.ShapeDtypeStruct((M, d_model), orig_dtype),
        grid_spec=pltpu.PrefetchScalarGridSpec(
            num_scalar_prefetch=0,
            grid=grid,
            in_specs=in_specs,
            out_specs=out_specs,
            scratch_shapes=scratch_shapes,
        ),
        compiler_params=pltpu.CompilerParams(
            dimension_semantics=dim_sem,
            vmem_limit_bytes=vmem_limit),
        cost_estimate=pl.CostEstimate(
            flops=flops, transcendentals=0, bytes_accessed=bytes_accessed),
    )(x2d, w1c, b1_2d, w2c, b2_2d)

    return out2d.reshape(*lead, d_model)


def init_params(key, d_model, d_ff, dtype=jnp.float32):
    # Deterministic init mimicking nn.Linear's uniform(-1/sqrt(fan_in), ...).
    k1, k2, k3, k4 = jax.random.split(key, 4)
    lim1 = 1.0 / (d_model ** 0.5)
    lim2 = 1.0 / (d_ff ** 0.5)
    # Stored as (in, out) so the kernel does x @ W (PyTorch stores (out, in)).
    w1 = jax.random.uniform(k1, (d_model, d_ff), dtype, -lim1, lim1)
    b1 = jax.random.uniform(k2, (d_ff,), dtype, -lim1, lim1)
    w2 = jax.random.uniform(k3, (d_ff, d_model), dtype, -lim2, lim2)
    b2 = jax.random.uniform(k4, (d_model,), dtype, -lim2, lim2)
    return w1, b1, w2, b2


if __name__ == "__main__":
    key = jax.random.PRNGKey(0)
    batch, seq, d_model, d_ff = 2, 8, 32, 64

    kx, kp = jax.random.split(key)
    x = jax.random.normal(kx, (batch, seq, d_model), jnp.float32)
    w1, b1, w2, b2 = init_params(kp, d_model, d_ff)

    # Pure-JAX f32 reference; tolerance accounts for bf16 matmul inputs
    # (f32 accumulation) inside the kernel.
    ref = jnp.maximum(x @ w1 + b1, 0.0) @ w2 + b2

    # 1) Default path at these sizes: fused kernel, weights resident in VMEM.
    out = positionwise_feedforward(x, w1, b1, w2, b2)
    out = jax.block_until_ready(out)
    assert out.shape == (batch, seq, d_model)
    assert jnp.allclose(out, ref, atol=5e-2, rtol=5e-2), (
        float(jnp.max(jnp.abs(out - ref))))

    # 2) Force the streamed (d_ff-chunked) accumulator path, including d_ff
    #    zero-padding, by pretending VMEM is tiny.  f32 output accumulates
    #    directly into the output block (no scratch).
    out_s = positionwise_feedforward(x, w1, b1, w2, b2,
                                     vmem_budget_bytes=1 << 14)
    out_s = jax.block_until_ready(out_s)
    assert jnp.allclose(out_s, ref, atol=5e-2, rtol=5e-2), (
        float(jnp.max(jnp.abs(out_s - ref))))

    # 3) bf16 activations exercise the f32-scratch streamed variant.
    out_b = positionwise_feedforward(x.astype(jnp.bfloat16), w1, b1, w2, b2,
                                     vmem_budget_bytes=1 << 14)
    out_b = jax.block_until_ready(out_b)
    assert jnp.allclose(out_b.astype(jnp.float32), ref,
                        atol=1.5e-1, rtol=1.5e-1), (
        float(jnp.max(jnp.abs(out_b.astype(jnp.float32) - ref))))

    print("KERNEL_OK")
</pallas_src>

<mosaic_0001>
module attributes {stable_mosaic.version = 11 : i64} {
  func.func @_ffn_kernel_fused(%arg0: i32, %arg1: memref<16x32xf32, #tpu.memory_space<vmem>>, %arg2: memref<32x64xbf16, #tpu.memory_space<vmem>>, %arg3: memref<1x64xf32, #tpu.memory_space<vmem>>, %arg4: memref<64x32xbf16, #tpu.memory_space<vmem>>, %arg5: memref<1x32xf32, #tpu.memory_space<vmem>>, %arg6: memref<16x32xf32, #tpu.memory_space<vmem>>) attributes {dimension_semantics = [#tpu.dimension_semantics<parallel>], iteration_bounds = array<i64: 1>, scalar_prefetch = 0 : i64, scratch_operands = 0 : i64, tpu.core_type = #tpu.core_type<tc>, window_params = [{transform_indices = @transform_0, window_bounds = array<i64: 16, 32>}, {pipeline_mode = #tpu.pipeline_mode<synchronous>, transform_indices = @transform_1, window_bounds = array<i64: 32, 64>}, {pipeline_mode = #tpu.pipeline_mode<synchronous>, transform_indices = @transform_2, window_bounds = array<i64: 1, 64>}, {pipeline_mode = #tpu.pipeline_mode<synchronous>, transform_indices = @transform_3, window_bounds = array<i64: 64, 32>}, {pipeline_mode = #tpu.pipeline_mode<synchronous>, transform_indices = @transform_4, window_bounds = array<i64: 1, 32>}, {transform_indices = @transform_5, window_bounds = array<i64: 16, 32>}]} {
    %c0 = arith.constant 0 : index
    %c0_0 = arith.constant 0 : index
    %0 = vector.load %arg1[%c0, %c0_0] : memref<16x32xf32, #tpu.memory_space<vmem>>, vector<16x32xf32>
    %1 = arith.truncf %0 : vector<16x32xf32> to vector<16x32xbf16>
    %c0_1 = arith.constant 0 : index
    %c0_2 = arith.constant 0 : index
    %2 = vector.load %arg2[%c0_1, %c0_2] : memref<32x64xbf16, #tpu.memory_space<vmem>>, vector<32x64xbf16>
    %cst = arith.constant dense<0.000000e+00> : vector<16x64xf32>
    %3 = tpu.matmul %1, %2, %cst {dimension_numbers = #tpu.dot_dimension_numbers<[1], [0], [0], [1], [0, 0, 1, 1], [], []>} : vector<16x32xbf16>, vector<32x64xbf16>, vector<16x64xf32> -> vector<16x64xf32>
    %c0_3 = arith.constant 0 : index
    %c0_4 = arith.constant 0 : index
    %4 = vector.load %arg3[%c0_3, %c0_4] : memref<1x64xf32, #tpu.memory_space<vmem>>, vector<1x64xf32>
    %5 = vector.broadcast %4 : vector<1x64xf32> to vector<16x64xf32>
    %6 = arith.addf %3, %5 : vector<16x64xf32>
    %cst_5 = arith.constant 0.000000e+00 : f32
    %7 = vector.broadcast %cst_5 : f32 to vector<16x64xf32>
    %8 = arith.maximumf %6, %7 : vector<16x64xf32>
    %9 = arith.truncf %8 : vector<16x64xf32> to vector<16x64xbf16>
    %c0_6 = arith.constant 0 : index
    %c0_7 = arith.constant 0 : index
    %10 = vector.load %arg4[%c0_6, %c0_7] : memref<64x32xbf16, #tpu.memory_space<vmem>>, vector<64x32xbf16>
    %cst_8 = arith.constant dense<0.000000e+00> : vector<16x32xf32>
    %11 = tpu.matmul %9, %10, %cst_8 {dimension_numbers = #tpu.dot_dimension_numbers<[1], [0], [0], [1], [0, 0, 1, 1], [], []>} : vector<16x64xbf16>, vector<64x32xbf16>, vector<16x32xf32> -> vector<16x32xf32>
    %c0_9 = arith.constant 0 : index
    %c0_10 = arith.constant 0 : index
    %12 = vector.load %arg5[%c0_9, %c0_10] : memref<1x32xf32, #tpu.memory_space<vmem>>, vector<1x32xf32>
    %13 = vector.broadcast %12 : vector<1x32xf32> to vector<16x32xf32>
    %14 = arith.addf %11, %13 : vector<16x32xf32>
    %c0_11 = arith.constant 0 : index
    %c0_12 = arith.constant 0 : index
    %15 = vector.load %arg6[%c0_11, %c0_12] : memref<16x32xf32, #tpu.memory_space<vmem>>, vector<16x32xf32>
    tpu.vector_store %arg6[%c0_11, %c0_12], %14 {strides = array<i32>} : memref<16x32xf32, #tpu.memory_space<vmem>>, vector<16x32xf32>,
    return
  }
  func.func @transform_0(%arg0: i32) -> (i32, i32) {
    %c0_i32 = arith.constant 0 : i32
    %c0_i32_0 = arith.constant 0 : i32
    return %arg0, %c0_i32 : i32, i32
  }
  func.func @transform_1(%arg0: i32) -> (i32, i32) {
    %c0_i32 = arith.constant 0 : i32
    %c0_i32_0 = arith.constant 0 : i32
    %c0_i32_1 = arith.constant 0 : i32
    return %c0_i32, %c0_i32_0 : i32, i32
  }
  func.func @transform_2(%arg0: i32) -> (i32, i32) {
    %c0_i32 = arith.constant 0 : i32
    %c0_i32_0 = arith.constant 0 : i32
    %c0_i32_1 = arith.constant 0 : i32
    return %c0_i32, %c0_i32_0 : i32, i32
  }
  func.func @transform_3(%arg0: i32) -> (i32, i32) {
    %c0_i32 = arith.constant 0 : i32
    %c0_i32_0 = arith.constant 0 : i32
    %c0_i32_1 = arith.constant 0 : i32
    return %c0_i32, %c0_i32_0 : i32, i32
  }
  func.func @transform_4(%arg0: i32) -> (i32, i32) {
    %c0_i32 = arith.constant 0 : i32
    %c0_i32_0 = arith.constant 0 : i32
    %c0_i32_1 = arith.constant 0 : i32
    return %c0_i32, %c0_i32_0 : i32, i32
  }
  func.func @transform_5(%arg0: i32) -> (i32, i32) {
    %c0_i32 = arith.constant 0 : i32
    %c0_i32_0 = arith.constant 0 : i32
    return %arg0, %c0_i32 : i32, i32
  }
}

</mosaic_0001>

<llo_original>
// kernel: tpu_custom_call.1
$region0: #{tpu_custom_call.1}
  #allocation0 [shape = 'u32[]', space=smem, size = 0x4, offset = 0x4, fixed_abs, tag = 'smem constant byte address 0x4 - core index']
  #allocation1 [shape = 'u32[144,128]{1,0:T(1,128)}', space=vmem, size = 0x12000, scoped, tag = 'internal scratch']
  %s0 = inlined_call_operand.vmem [shape: f32[16,32], index: 0, kind: input, shape index: {}]
  %s1 = inlined_call_operand.vmem [shape: bf16[32,64], index: 1, kind: input, shape index: {}]
  %s2 = inlined_call_operand.vmem [shape: f32[1,64], index: 2, kind: input, shape index: {}]
  %s3 = inlined_call_operand.vmem [shape: bf16[64,32], index: 3, kind: input, shape index: {}]
  %s4 = inlined_call_operand.vmem [shape: f32[1,32], index: 4, kind: input, shape index: {}]
  %s5 = inlined_call_operand.hbm [shape: f32[16,32], index: 5, kind: output, shape index: {}]
  %s6 = sld [smem:[#allocation0]]
  $region30: #{tpu_custom_call.1} parent=0
    _
  %s8 = ssub.s32 1, %s6
  %s9 = scalar_select 0, %s8, %s6
  $region1: #{tpu_custom_call.1} parent=0
    #allocation2 [shape = 'u8[8192]{0}', space=vmem, size = 0x2000, scoped, tag = 'output window, operand 0, single buffered']
    #allocation3 [shape = 's32[1]{0}', space=sflag, size = 0x4, scoped, tag = 'scoped memory for tpu_custom_call.1']
    %10 = vsyncpa [#allocation3], 0
    // Predicated region
    $region2: #{tpu_custom_call.1} parent=1 // pred_check
      _
    $region3: #{tpu_custom_call.1} parent=1 // pred_check_branch
      %12 = sbr.rel (0) target = $region5
    $region4: #{tpu_custom_call.1} parent=1 // pred_region
      _
    $region5: #{tpu_custom_call.1} parent=1 // pred_fallthru
      _
    // Predicated region
    $region6: #{tpu_custom_call.1} parent=1 // pred_check
      _
    $region7: #{tpu_custom_call.1} parent=1 // pred_check_branch
      %14 = sbr.rel (0) target = $region9
    $region8: #{tpu_custom_call.1} parent=1 // pred_region
      _
    $region9: #{tpu_custom_call.1} parent=1 // pred_fallthru
      _
    // Predicated region
    $region10: #{tpu_custom_call.1} parent=1 // pred_check
      _
    $region11: #{tpu_custom_call.1} parent=1 // pred_check_branch
      %16 = sbr.rel (0) target = $region13
    $region12: #{tpu_custom_call.1} parent=1 // pred_region
      _
    $region13: #{tpu_custom_call.1} parent=1 // pred_fallthru
      _
    // Predicated region
    $region14: #{tpu_custom_call.1} parent=1 // pred_check
      _
    $region15: #{tpu_custom_call.1} parent=1 // pred_check_branch
      %18 = sbr.rel (0) target = $region17
    $region16: #{tpu_custom_call.1} parent=1 // pred_region
      _
    $region17: #{tpu_custom_call.1} parent=1 // pred_fallthru
      _
    // Predicated region
    $region18: #{tpu_custom_call.1} parent=1 // pred_check
      _
    $region19: #{tpu_custom_call.1} parent=1 // pred_check_branch
      %20 = sbr.rel (0) target = $region21
    $region20: #{tpu_custom_call.1} parent=1 // pred_region
      _
    $region21: #{tpu_custom_call.1} parent=1 // pred_fallthru
      _
    %v22 = vld [vmem:[%s0] sm:$0xff]
    %v23 = vld [vmem:[%s0 + $0x8] sm:$0xff]
    %v24 = vpack.c.bf16 %v23, %v22
    %v25 = vld [vmem:[%s1] sm:$0xf]
    %v26 = vld [vmem:[%s1 + $0x4] sm:$0xf]
    %v27 = vld [vmem:[%s1 + $0x8] sm:$0xf]
    %v28 = vld [vmem:[%s1 + $0xc] sm:$0xf]
    %v29 = vld [vmem:[%s2] sm:$0x1]
    %v31 = vlaneseq
    %v32 = vshrl.u32 %v31, 7
    %v33 = vsub.s32 0, %v32
    %v34 = vrot.slane %v29, %v33
    %v40 = vunpack.c.l.b16 %v25
    %v41 = vunpack.c.l.b16 %v26
    %v42 = vunpack.c.l.b16 %v27
    %v43 = vunpack.c.l.b16 %v28
    %v44 = vpack.c.b16 %v41, %v40
    %v45 = vpack.c.b16 %v43, %v42
    %vm48 = vcmask 261120
    %v50 = vsel %vm48, %v24, 0
    %52 = vmatprep.subr.bf16.mxu0 0
    %53 = vmatpush1.bf16.msra.mxu0 0
    %54 = vmatprep.subr.bf16.mxu0 0
    %55 = vmatpush1.bf16.msra.mxu0 0
    %56 = vmatprep.subr.bf16.mxu0 0
    %57 = vmatpush1.bf16.msra.mxu0 0
    %58 = vmatprep.subr.bf16.mxu0 0
    %59 = vmatpush1.bf16.msra.mxu0 0
    %60 = vmatprep.subr.bf16.mxu0 0
    %61 = vmatpush1.bf16.msra.mxu0 0
    %62 = vmatprep.subr.bf16.mxu0 0
    %63 = vmatpush1.bf16.msra.mxu0 0
    %64 = vmatprep.subr.bf16.mxu0 0
    %65 = vmatpush1.bf16.msra.mxu0 %v45
    %66 = vmatprep.subr.bf16.mxu0 0
    %67 = vmatpush1.bf16.msra.mxu0 %v44
    %68 = vmatprep.subr.bf16.mxu0 0
    %69 = vmatpush2.bf16.msra.mxu0 0
    %70 = vmatprep.subr.bf16.mxu0 0
    %71 = vmatpush2.bf16.msra.mxu0 0
    %72 = vmatprep.subr.bf16.mxu0 0
    %73 = vmatpush2.bf16.msra.mxu0 0
    %74 = vmatprep.subr.bf16.mxu0 0
    %75 = vmatpush2.bf16.msra.mxu0 0
    %76 = vmatprep.subr.bf16.mxu0 0
    %77 = vmatpush2.bf16.msra.mxu0 0
    %78 = vmatprep.subr.bf16.mxu0 0
    %79 = vmatpush2.bf16.msra.mxu0 0
    %80 = vmatprep.subr.bf16.mxu0 0
    %81 = vmatpush2.bf16.msra.mxu0 0
    %82 = vmatprep.subr.bf16.mxu0 0
    %83 = vmatpush2.bf16.msra.mxu0 0
    %84 = vmatprep.mubr.bf16.mxu0 0
    %85 = vmatmul.mubr.bf16.gmra.mxu0 %v50
    %v86 = vpop.f32.mrf.mxu0
    %v87 = vadd.f32 %v34, %v86
    %v88 = vpop.f32.mrf.mxu0
    %v89 = vpop.f32.mrf.mxu0
    %v90 = vadd.f32 %v34, %v89
    %v91 = vpop.f32.mrf.mxu0
    %92 = vdwg.mxu0
    %v93 = vmax.f32 %v87, 0.0
    %v94 = vmax.f32 %v90, 0.0
    %v95 = vpack.c.bf16 %v94, %v93
    %v96 = vld [vmem:[%s3] sm:$0xf]
    %v97 = vld [vmem:[%s3 + $0x4] sm:$0xf]
    %v98 = vld [vmem:[%s3 + $0x8] sm:$0xf]
    %v99 = vld [vmem:[%s3 + $0xc] sm:$0xf]
    %v100 = vld [vmem:[%s3 + $0x10] sm:$0xf]
    %v101 = vld [vmem:[%s3 + $0x14] sm:$0xf]
    %v102 = vld [vmem:[%s3 + $0x18] sm:$0xf]
    %v103 = vld [vmem:[%s3 + $0x1c] sm:$0xf]
    %v104 = vld [vmem:[%s4] sm:$0x1]
    %v106 = vlaneseq
    %v107 = vshrl.u32 %v106, 7
    %v108 = vsub.s32 0, %v107
    %v109 = vrot.slane %v104, %v108
    %v119 = vunpack.c.l.b16 %v96
    %v120 = vunpack.c.l.b16 %v97
    %v121 = vunpack.c.l.b16 %v98
    %v122 = vunpack.c.l.b16 %v99
    %v123 = vunpack.c.l.b16 %v100
    %v124 = vunpack.c.l.b16 %v101
    %v125 = vunpack.c.l.b16 %v102
    %v126 = vunpack.c.l.b16 %v103
    %v127 = vpack.c.b16 %v120, %v119
    %v128 = vpack.c.b16 %v122, %v121
    %v129 = vpack.c.b16 %v124, %v123
    %v130 = vpack.c.b16 %v126, %v125
    %vm135 = vcmask 523264
    %v137 = vsel %vm135, %v95, 0
    %139 = vmatprep.subr.bf16.mxu0 0
    %140 = vmatpush1.bf16.msra.mxu0 0
    %141 = vmatprep.subr.bf16.mxu0 0
    %142 = vmatpush1.bf16.msra.mxu0 0
    %143 = vmatprep.subr.bf16.mxu0 0
    %144 = vmatpush1.bf16.msra.mxu0 0
    %145 = vmatprep.subr.bf16.mxu0 0
    %146 = vmatpush1.bf16.msra.mxu0 0
    %147 = vmatprep.subr.bf16.mxu0 0
    %148 = vmatpush1.bf16.msra.mxu0 %v130
    %149 = vmatprep.subr.bf16.mxu0 0
    %150 = vmatpush1.bf16.msra.mxu0 %v129
    %151 = vmatprep.subr.bf16.mxu0 0
    %152 = vmatpush1.bf16.msra.mxu0 %v128
    %153 = vmatprep.subr.bf16.mxu0 0
    %154 = vmatpush1.bf16.msra.mxu0 %v127
    %155 = vmatprep.subr.bf16.mxu0 0
    %156 = vmatpush2.bf16.msra.mxu0 0
    %157 = vmatprep.subr.bf16.mxu0 0
    %158 = vmatpush2.bf16.msra.mxu0 0
    %159 = vmatprep.subr.bf16.mxu0 0
    %160 = vmatpush2.bf16.msra.mxu0 0
    %161 = vmatprep.subr.bf16.mxu0 0
    %162 = vmatpush2.bf16.msra.mxu0 0
    %163 = vmatprep.subr.bf16.mxu0 0
    %164 = vmatpush2.bf16.msra.mxu0 0
    %165 = vmatprep.subr.bf16.mxu0 0
    %166 = vmatpush2.bf16.msra.mxu0 0
    %167 = vmatprep.subr.bf16.mxu0 0
    %168 = vmatpush2.bf16.msra.mxu0 0
    %169 = vmatprep.subr.bf16.mxu0 0
    %170 = vmatpush2.bf16.msra.mxu0 0
    %171 = vmatprep.mubr.bf16.mxu0 0
    %172 = vmatmul.mubr.bf16.gmra.mxu0 %v137
    %v173 = vpop.f32.mrf.mxu0
    %v174 = vadd.f32 %v109, %v173
    %v175 = vpop.f32.mrf.mxu0
    %v176 = vpop.f32.mrf.mxu0
    %v177 = vadd.f32 %v109, %v176
    %v178 = vpop.f32.mrf.mxu0
    %179 = vdwg.mxu0
    %180 = vst.msk [vmem:[#allocation2] sm:$0xff] %vm48, %v174
    %181 = vst.msk [vmem:[#allocation2 + $0x8] sm:$0xff] %vm48, %v177
    // Predicated region
    $region22: #{tpu_custom_call.1} parent=1 // pred_check
      _
    $region23: #{tpu_custom_call.1} parent=1 // pred_check_branch
      %183 = sbr.rel (0) target = $region25
    $region24: #{tpu_custom_call.1} parent=1 // pred_region
      %s185 = ssub.s32 256, 256
      %186 = vsyncadd [#allocation3], %s185
      %s187 = sshll.u32 [#allocation2], 4
      %s188 = int_to_ptr.vmem [resolvable:$true] %s187
      %193 = dma.vmem_to_hbm [thread:$0]  %s188, 256, %s5, [#allocation3], 128, 128, 8
    $region25: #{tpu_custom_call.1} parent=1 // pred_fallthru
      _
    // Predicated region
    $region26: #{tpu_custom_call.1} parent=1 // pred_check
      _
    $region27: #{tpu_custom_call.1} parent=1 // pred_check_branch
      %195 = sbr.rel (0) target = $region29
    $region28: #{tpu_custom_call.1} parent=1 // pred_region
      %196 = dma.done [#allocation3], 256
    $region29: #{tpu_custom_call.1} parent=1 // pred_fallthru
      _
    %197 = vsyncpa [#allocation3], 1

</llo_original>
